<compile_context>
chip_gen: v7x
topology: tpu7x:2x2x1
jax: 0.10.0
libtpu: 0.0.40
codegen_flags: <defaults>
</compile_context>

<pallas_src>
import functools

import jax
import jax.numpy as jnp
from jax.experimental import pallas as pl
from jax.experimental.pallas import tpu as pltpu


# ----------------------------------------------------------------------------
# Pallas kernel
# ----------------------------------------------------------------------------
def _dglnet_head_kernel(x_ref, mask_ref, wA, bA, w3B, b3B, w3b, b3b,
                        out_ref, col_ref, *, H, W, C):
    # x_ref:    (C, LB)   lanes = whole images; LB = imgs_per_block * H * W
    # mask_ref: (8, LB)   zero-padding masks for the 8 non-centre 3x3 taps
    # out_ref:  (4, LB)   rows = [aux1, aux2, aux3, conv3-branch]
    # col_ref:  (9C, LB)  VMEM scratch: im2col of x3
    x = x_ref[...]

    # Fused 1x1 matmul A: rows [conv1 (BN-folded); conv2 (BN-folded); aux1].
    a = jnp.dot(wA[...], x, preferred_element_type=jnp.float32) + bA[...]
    x3 = jnp.maximum(a[0:C, :], 0.0)           # cat(x1, x2), already fused
    out_ref[0:1, :] = a[C:C + 1, :]            # out1 = aux1(x)  (no ReLU)

    # im2col of x3 for the 3x3/pad=1 conv, built from lane rolls (XLU) and the
    # precomputed boundary masks (one vmul per tap).  Valid positions never
    # wrap across image boundaries inside a block; invalid ones are zeroed.
    masks = mask_ref[...]
    LB = x.shape[1]
    mrow = 0
    tap = 0
    for dy in (-1, 0, 1):
        for dx in (-1, 0, 1):
            if dy == 0 and dx == 0:
                col_ref[tap * C:(tap + 1) * C, :] = x3
            else:
                shift = (-(dy * W + dx)) % LB
                rolled = pltpu.roll(x3, shift, axis=1)
                col_ref[tap * C:(tap + 1) * C, :] = (
                    rolled * masks[mrow:mrow + 1, :])
                mrow += 1
            tap += 1

    # Fused matmul B: rows 0:C = 3x3 conv (BN-folded), rows C:C+2 = aux2/aux3
    # (weights are zero outside the centre-tap columns).
    t = jnp.dot(w3B[...], col_ref[...], preferred_element_type=jnp.float32)
    t = t + b3B[...]
    y3 = jnp.maximum(t[0:C, :], 0.0)           # ReLU only on the conv rows
    out_ref[1:3, :] = t[C:C + 2, :]            # out2, out3 (no ReLU)

    # Final 1x1 (C -> 1) conv: broadcast-multiply + sublane reduce (no MXU).
    out_ref[3:4, :] = jnp.sum(y3 * w3b[...], axis=0, keepdims=True) + b3b[...]


# ----------------------------------------------------------------------------
# Wrapper helpers
# ----------------------------------------------------------------------------
def _pick_imgs_per_block(N, HW, max_lanes=2048, min_steps=2):
    """Largest number of whole images per grid step such that the lane block is
    128-aligned, fits the lane budget and (if possible) leaves >= min_steps
    grid steps for the v7x megacore split."""
    divisors = [d for d in range(1, N + 1) if N % d == 0]
    aligned = [d for d in divisors if (d * HW) % 128 == 0]
    ok = [d for d in aligned if d * HW <= max_lanes and N // d >= min_steps]
    if ok:
        return max(ok)
    ok = [d for d in aligned if d * HW <= max_lanes]
    if ok:
        return max(ok)
    if aligned:
        return min(aligned)
    return N  # unaligned fallback: single block == full array dims


def _build_tap_masks(H, W, imgs_per_block):
    """(8, imgs_per_block*H*W) f32 masks for the 8 non-centre 3x3 taps
    (zero-padding semantics), periodic per image within a block."""
    HW = H * W
    hw = jnp.arange(HW, dtype=jnp.int32)
    h = hw // W
    w = hw % W
    rows = []
    for dy in (-1, 0, 1):
        for dx in (-1, 0, 1):
            if dy == 0 and dx == 0:
                continue
            valid = ((h + dy >= 0) & (h + dy < H) &
                     (w + dx >= 0) & (w + dx < W))
            rows.append(valid.astype(jnp.float32))
    mask = jnp.stack(rows, axis=0)                   # (8, HW)
    return jnp.tile(mask, (1, imgs_per_block))       # (8, LB)


def dglnet_head_forward(x_nchw, fp, *, max_lanes_per_step=2048):
    """x_nchw: (N, C, H, W) float32; fp: dict of fused/BN-folded parameters."""
    N, C, H, W = x_nchw.shape
    HW = H * W
    d = _pick_imgs_per_block(N, HW, max_lanes=max_lanes_per_step)
    G = N // d
    LB = d * HW

    # Channels on sublanes, batch*spatial on lanes (lane-dense everywhere).
    x_t = jnp.transpose(x_nchw.reshape(N, C, HW).astype(jnp.float32),
                        (1, 0, 2)).reshape(C, N * HW)
    mask = _build_tap_masks(H, W, d)

    weights = [fp["wA"], fp["bA"], fp["w3B"], fp["b3B"], fp["w3b"], fp["b3b"]]

    x_spec_kwargs = {}
    if G > 2:
        # Sub-microsecond per-step compute: deepen the x pipeline on long grids.
        x_spec_kwargs["pipeline_mode"] = pl.Buffered(3)
    in_specs = [pl.BlockSpec((C, LB), lambda i: (0, i), **x_spec_kwargs),
                pl.BlockSpec((8, LB), lambda i: (0, 0))]
    for wgt in weights:
        nd = wgt.ndim
        in_specs.append(pl.BlockSpec(wgt.shape, lambda i, _nd=nd: (0,) * _nd))

    flops = N * HW * (2 * (C + 1) * C + 2 * (C + 2) * 9 * C + 8 * C + 2 * C)
    bytes_accessed = 4 * (x_t.size + 4 * N * HW + mask.size
                          + sum(int(w.size) for w in weights))

    # Per-step VMEM: x/out double-buffered + mask + im2col scratch + headroom.
    vmem_bytes = 4 * LB * (2 * C + 2 * 4 + 8 + 9 * C) + (2 << 20)
    vmem_bytes = int(min(max(vmem_bytes, 16 * 1024 * 1024), 48 * 1024 * 1024))

    out = pl.pallas_call(
        functools.partial(_dglnet_head_kernel, H=H, W=W, C=C),
        out_shape=jax.ShapeDtypeStruct((4, N * HW), jnp.float32),
        grid=(G,),
        in_specs=in_specs,
        out_specs=pl.BlockSpec((4, LB), lambda i: (0, i)),
        scratch_shapes=[pltpu.VMEM((9 * C, LB), jnp.float32)],
        compiler_params=pltpu.CompilerParams(
            dimension_semantics=("parallel",),
            vmem_limit_bytes=vmem_bytes),
        cost_estimate=pl.CostEstimate(
            flops=flops, transcendentals=0, bytes_accessed=bytes_accessed),
    )(x_t, mask, *weights)

    # (4, N*HW) -> (N, 4, H, W): cheap (output is only 4 channels).
    return jnp.transpose(out.reshape(4, N, HW), (1, 0, 2)).reshape(N, 4, H, W)


# ----------------------------------------------------------------------------
# Deterministic parameter construction (synthetic, matches nn.Module shapes)
# ----------------------------------------------------------------------------
def init_raw_params(key, C):
    Ch = C // 2
    keys = jax.random.split(key, 32)
    it = iter(keys)

    def rn(shape, scale=0.2):
        return scale * jax.random.normal(next(it), shape, jnp.float32)

    p = {}
    # aux convs: weight stored as (out, in)
    p["w_aux1"] = rn((1, C));  p["b_aux1"] = rn((1,))
    p["w_aux2"] = rn((1, Ch)); p["b_aux2"] = rn((1,))
    p["w_aux3"] = rn((1, Ch)); p["b_aux3"] = rn((1,))
    # conv1: 1x1 (C->Ch) + BN(Ch)
    p["w1"] = rn((Ch, C)); p["b1"] = rn((Ch,))
    p["g1"] = 1.0 + rn((Ch,), 0.05); p["beta1"] = rn((Ch,))
    p["m1"] = rn((Ch,)); p["v1"] = 1.0 + jnp.abs(rn((Ch,), 0.1))
    # conv2: 1x1 (C->Ch) + BN(Ch)
    p["w2"] = rn((Ch, C)); p["b2"] = rn((Ch,))
    p["g2"] = 1.0 + rn((Ch,), 0.05); p["beta2"] = rn((Ch,))
    p["m2"] = rn((Ch,)); p["v2"] = 1.0 + jnp.abs(rn((Ch,), 0.1))
    # conv3: 3x3 (C->C, pad=1) + BN(C) + ReLU + 1x1 (C->1); weight OIHW
    p["w3a"] = rn((C, C, 3, 3), 0.1); p["b3a"] = rn((C,))
    p["g3"] = 1.0 + rn((C,), 0.05); p["beta3"] = rn((C,))
    p["m3"] = rn((C,)); p["v3"] = 1.0 + jnp.abs(rn((C,), 0.1))
    p["w3b"] = rn((1, C)); p["b3b"] = rn((1,))
    return p


def fold_params(p, eps=1e-5):
    """Fold eval-mode BN into the preceding conv and fuse weights for the kernel."""
    def fold(w, b, g, beta, m, v):
        s = g / jnp.sqrt(v + eps)
        wf = w * s.reshape((-1,) + (1,) * (w.ndim - 1))
        bf = (b - m) * s + beta
        return wf, bf

    C = p["w_aux1"].shape[1]
    Ch = C // 2

    w1f, b1f = fold(p["w1"], p["b1"], p["g1"], p["beta1"], p["m1"], p["v1"])
    w2f, b2f = fold(p["w2"], p["b2"], p["g2"], p["beta2"], p["m2"], p["v2"])

    f = {}
    # Fused "A": rows [conv1; conv2; aux1]  -> (C+1, C)
    f["wA"] = jnp.concatenate([w1f, w2f, p["w_aux1"]], axis=0)
    f["bA"] = jnp.concatenate([b1f, b2f, p["b_aux1"]]).reshape(-1, 1)

    # 3x3 conv folded with BN, laid out (C_out, 9*C_in): taps (kh, kw) outer,
    # input channel inner -- matches the kernel's im2col row layout.
    w3f, b3f = fold(p["w3a"], p["b3a"], p["g3"], p["beta3"], p["m3"], p["v3"])
    w3_flat = jnp.transpose(w3f, (0, 2, 3, 1)).reshape(C, 9 * C)

    # aux2/aux3 folded in as 2 extra output rows that only read the centre-tap
    # (dy=dx=0 -> tap index 4) columns of the im2col: aux2 sees x1, aux3 sees x2.
    wB = jnp.zeros((2, 9 * C), jnp.float32)
    wB = wB.at[0, 4 * C:4 * C + Ch].set(p["w_aux2"][0])
    wB = wB.at[1, 4 * C + Ch:5 * C].set(p["w_aux3"][0])

    f["w3B"] = jnp.concatenate([w3_flat, wB], axis=0)            # (C+2, 9C)
    f["b3B"] = jnp.concatenate(
        [b3f, p["b_aux2"], p["b_aux3"]]).reshape(C + 2, 1)

    # Final 1x1 (C -> 1): stored (C, 1) for broadcast-multiply + sublane reduce.
    f["w3b"] = p["w3b"].reshape(C, 1)
    f["b3b"] = p["b3b"].reshape(1, 1)
    return f


# ----------------------------------------------------------------------------
# Pure-JAX reference (raw params, explicit eval-mode BN, NCHW throughout)
# ----------------------------------------------------------------------------
def ref_forward(x, p, eps=1e-5):
    def c1x1(t, w, b):  # w: (Cout, Cin)
        return jnp.einsum("nchw,oc->nohw", t, w) + b.reshape(1, -1, 1, 1)

    def bn(t, g, beta, m, v):
        g, beta, m, v = (a.reshape(1, -1, 1, 1) for a in (g, beta, m, v))
        return (t - m) / jnp.sqrt(v + eps) * g + beta

    relu = lambda t: jnp.maximum(t, 0.0)

    out1 = c1x1(x, p["w_aux1"], p["b_aux1"])
    x1 = relu(bn(c1x1(x, p["w1"], p["b1"]), p["g1"], p["beta1"], p["m1"], p["v1"]))
    x2 = relu(bn(c1x1(x, p["w2"], p["b2"]), p["g2"], p["beta2"], p["m2"], p["v2"]))
    out2 = c1x1(x1, p["w_aux2"], p["b_aux2"])
    out3 = c1x1(x2, p["w_aux3"], p["b_aux3"])
    x3 = jnp.concatenate([x1, x2], axis=1)
    y = jax.lax.conv_general_dilated(
        x3, p["w3a"], (1, 1), ((1, 1), (1, 1)),
        dimension_numbers=("NCHW", "OIHW", "NCHW")) + p["b3a"].reshape(1, -1, 1, 1)
    y = relu(bn(y, p["g3"], p["beta3"], p["m3"], p["v3"]))
    out4 = c1x1(y, p["w3b"], p["b3b"])
    return jnp.concatenate([out1, out2, out3, out4], axis=1)


# ----------------------------------------------------------------------------
if __name__ == "__main__":
    N, C, H, W = 2, 8, 16, 16          # in_channels = 8 -> C//2 = 4
    key = jax.random.PRNGKey(0)
    kx, kp = jax.random.split(key)

    x = jax.random.normal(kx, (N, C, H, W), jnp.float32)
    raw = init_raw_params(kp, C)
    folded = fold_params(raw)

    out = dglnet_head_forward(x, folded)
    out = jax.block_until_ready(out)

    assert out.shape == (N, 4, H, W), out.shape

    ref = ref_forward(x, raw)
    err = float(jnp.max(jnp.abs(out - ref)))
    # Tolerance documents the BN-folding order-of-operations gap (f32 math,
    # folded scale/bias vs. explicit normalize-then-affine).
    assert err < 3e-3, f"max abs err {err}"

    print("KERNEL_OK")
</pallas_src>

<mosaic_0001>
module attributes {stable_mosaic.version = 11 : i64} {
  func.func @_dglnet_head_kernel(%arg0: i32, %arg1: memref<8x256xf32, #tpu.memory_space<vmem>>, %arg2: memref<8x256xf32, #tpu.memory_space<vmem>>, %arg3: memref<9x8xf32, #tpu.memory_space<vmem>>, %arg4: memref<9x1xf32, #tpu.memory_space<vmem>>, %arg5: memref<10x72xf32, #tpu.memory_space<vmem>>, %arg6: memref<10x1xf32, #tpu.memory_space<vmem>>, %arg7: memref<8x1xf32, #tpu.memory_space<vmem>>, %arg8: memref<1x1xf32, #tpu.memory_space<vmem>>, %arg9: memref<4x256xf32, #tpu.memory_space<vmem>>, %arg10: memref<72x256xf32, #tpu.memory_space<vmem>>) attributes {dimension_semantics = [#tpu.dimension_semantics<parallel>], iteration_bounds = array<i64: 2>, scalar_prefetch = 0 : i64, scratch_operands = 1 : i64, tpu.core_type = #tpu.core_type<tc>, window_params = [{transform_indices = @transform_0, window_bounds = array<i64: 8, 256>}, {pipeline_mode = #tpu.pipeline_mode<synchronous>, transform_indices = @transform_1, window_bounds = array<i64: 8, 256>}, {pipeline_mode = #tpu.pipeline_mode<synchronous>, transform_indices = @transform_2, window_bounds = array<i64: 9, 8>}, {pipeline_mode = #tpu.pipeline_mode<synchronous>, transform_indices = @transform_3, window_bounds = array<i64: 9, 1>}, {pipeline_mode = #tpu.pipeline_mode<synchronous>, transform_indices = @transform_4, window_bounds = array<i64: 10, 72>}, {pipeline_mode = #tpu.pipeline_mode<synchronous>, transform_indices = @transform_5, window_bounds = array<i64: 10, 1>}, {pipeline_mode = #tpu.pipeline_mode<synchronous>, transform_indices = @transform_6, window_bounds = array<i64: 8, 1>}, {pipeline_mode = #tpu.pipeline_mode<synchronous>, transform_indices = @transform_7, window_bounds = array<i64: 1, 1>}, {transform_indices = @transform_8, window_bounds = array<i64: 4, 256>}]} {
    %c0 = arith.constant 0 : index
    %c0_0 = arith.constant 0 : index
    %0 = vector.load %arg1[%c0, %c0_0] : memref<8x256xf32, #tpu.memory_space<vmem>>, vector<8x256xf32>
    %c0_1 = arith.constant 0 : index
    %c0_2 = arith.constant 0 : index
    %1 = vector.load %arg3[%c0_1, %c0_2] : memref<9x8xf32, #tpu.memory_space<vmem>>, vector<9x8xf32>
    %cst = arith.constant dense<0.000000e+00> : vector<9x256xf32>
    %2 = tpu.matmul %1, %0, %cst {dimension_numbers = #tpu.dot_dimension_numbers<[1], [0], [0], [1], [0, 0, 1, 1], [], []>} : vector<9x8xf32>, vector<8x256xf32>, vector<9x256xf32> -> vector<9x256xf32>
    %c0_3 = arith.constant 0 : index
    %c0_4 = arith.constant 0 : index
    %3 = vector.load %arg4[%c0_3, %c0_4] : memref<9x1xf32, #tpu.memory_space<vmem>>, vector<9x1xf32>
    %4 = vector.broadcast %3 : vector<9x1xf32> to vector<9x256xf32>
    %5 = arith.addf %2, %4 : vector<9x256xf32>
    %6 = vector.extract_strided_slice %5 {offsets = [0, 0], sizes = [8, 256], strides = [1, 1]} : vector<9x256xf32> to vector<8x256xf32>
    %cst_5 = arith.constant 0.000000e+00 : f32
    %7 = vector.broadcast %cst_5 : f32 to vector<8x256xf32>
    %8 = arith.maximumf %6, %7 : vector<8x256xf32>
    %9 = vector.extract_strided_slice %5 {offsets = [8, 0], sizes = [1, 256], strides = [1, 1]} : vector<9x256xf32> to vector<1x256xf32>
    %c0_6 = arith.constant 0 : index
    %c0_7 = arith.constant 0 : index
    %10 = vector.load %arg9[%c0_6, %c0_7] : memref<4x256xf32, #tpu.memory_space<vmem>>, vector<1x256xf32>
    tpu.vector_store %arg9[%c0_6, %c0_7], %9 {strides = array<i32>} : memref<4x256xf32, #tpu.memory_space<vmem>>, vector<1x256xf32>,
    %c0_8 = arith.constant 0 : index
    %c0_9 = arith.constant 0 : index
    %11 = vector.load %arg2[%c0_8, %c0_9] : memref<8x256xf32, #tpu.memory_space<vmem>>, vector<8x256xf32>
    %c17_i32 = arith.constant 17 : i32
    %12 = tpu.dynamic_rotate %8 by %c17_i32 dim 1 : vector<8x256xf32>, i32 -> vector<8x256xf32>
    %13 = vector.extract_strided_slice %11 {offsets = [0, 0], sizes = [1, 256], strides = [1, 1]} : vector<8x256xf32> to vector<1x256xf32>
    %14 = vector.broadcast %13 : vector<1x256xf32> to vector<8x256xf32>
    %15 = arith.mulf %12, %14 : vector<8x256xf32>
    %c0_10 = arith.constant 0 : index
    %c0_11 = arith.constant 0 : index
    %16 = vector.load %arg10[%c0_10, %c0_11] : memref<72x256xf32, #tpu.memory_space<vmem>>, vector<8x256xf32>
    tpu.vector_store %arg10[%c0_10, %c0_11], %15 {strides = array<i32>} : memref<72x256xf32, #tpu.memory_space<vmem>>, vector<8x256xf32>,
    %c16_i32 = arith.constant 16 : i32
    %17 = tpu.dynamic_rotate %8 by %c16_i32 dim 1 : vector<8x256xf32>, i32 -> vector<8x256xf32>
    %18 = vector.extract_strided_slice %11 {offsets = [1, 0], sizes = [1, 256], strides = [1, 1]} : vector<8x256xf32> to vector<1x256xf32>
    %19 = vector.broadcast %18 : vector<1x256xf32> to vector<8x256xf32>
    %20 = arith.mulf %17, %19 : vector<8x256xf32>
    %c8 = arith.constant 8 : index
    %c0_12 = arith.constant 0 : index
    %21 = vector.load %arg10[%c8, %c0_12] : memref<72x256xf32, #tpu.memory_space<vmem>>, vector<8x256xf32>
    tpu.vector_store %arg10[%c8, %c0_12], %20 {strides = array<i32>} : memref<72x256xf32, #tpu.memory_space<vmem>>, vector<8x256xf32>,
    %c15_i32 = arith.constant 15 : i32
    %22 = tpu.dynamic_rotate %8 by %c15_i32 dim 1 : vector<8x256xf32>, i32 -> vector<8x256xf32>
    %23 = vector.extract_strided_slice %11 {offsets = [2, 0], sizes = [1, 256], strides = [1, 1]} : vector<8x256xf32> to vector<1x256xf32>
    %24 = vector.broadcast %23 : vector<1x256xf32> to vector<8x256xf32>
    %25 = arith.mulf %22, %24 : vector<8x256xf32>
    %c16 = arith.constant 16 : index
    %c0_13 = arith.constant 0 : index
    %26 = vector.load %arg10[%c16, %c0_13] : memref<72x256xf32, #tpu.memory_space<vmem>>, vector<8x256xf32>
    tpu.vector_store %arg10[%c16, %c0_13], %25 {strides = array<i32>} : memref<72x256xf32, #tpu.memory_space<vmem>>, vector<8x256xf32>,
    %c1_i32 = arith.constant 1 : i32
    %27 = tpu.dynamic_rotate %8 by %c1_i32 dim 1 : vector<8x256xf32>, i32 -> vector<8x256xf32>
    %28 = vector.extract_strided_slice %11 {offsets = [3, 0], sizes = [1, 256], strides = [1, 1]} : vector<8x256xf32> to vector<1x256xf32>
    %29 = vector.broadcast %28 : vector<1x256xf32> to vector<8x256xf32>
    %30 = arith.mulf %27, %29 : vector<8x256xf32>
    %c24 = arith.constant 24 : index
    %c0_14 = arith.constant 0 : index
    %31 = vector.load %arg10[%c24, %c0_14] : memref<72x256xf32, #tpu.memory_space<vmem>>, vector<8x256xf32>
    tpu.vector_store %arg10[%c24, %c0_14], %30 {strides = array<i32>} : memref<72x256xf32, #tpu.memory_space<vmem>>, vector<8x256xf32>,
    %c32 = arith.constant 32 : index
    %c0_15 = arith.constant 0 : index
    %32 = vector.load %arg10[%c32, %c0_15] : memref<72x256xf32, #tpu.memory_space<vmem>>, vector<8x256xf32>
    tpu.vector_store %arg10[%c32, %c0_15], %8 {strides = array<i32>} : memref<72x256xf32, #tpu.memory_space<vmem>>, vector<8x256xf32>,
    %c255_i32 = arith.constant 255 : i32
    %33 = tpu.dynamic_rotate %8 by %c255_i32 dim 1 : vector<8x256xf32>, i32 -> vector<8x256xf32>
    %34 = vector.extract_strided_slice %11 {offsets = [4, 0], sizes = [1, 256], strides = [1, 1]} : vector<8x256xf32> to vector<1x256xf32>
    %35 = vector.broadcast %34 : vector<1x256xf32> to vector<8x256xf32>
    %36 = arith.mulf %33, %35 : vector<8x256xf32>
    %c40 = arith.constant 40 : index
    %c0_16 = arith.constant 0 : index
    %37 = vector.load %arg10[%c40, %c0_16] : memref<72x256xf32, #tpu.memory_space<vmem>>, vector<8x256xf32>
    tpu.vector_store %arg10[%c40, %c0_16], %36 {strides = array<i32>} : memref<72x256xf32, #tpu.memory_space<vmem>>, vector<8x256xf32>,
    %c241_i32 = arith.constant 241 : i32
    %38 = tpu.dynamic_rotate %8 by %c241_i32 dim 1 : vector<8x256xf32>, i32 -> vector<8x256xf32>
    %39 = vector.extract_strided_slice %11 {offsets = [5, 0], sizes = [1, 256], strides = [1, 1]} : vector<8x256xf32> to vector<1x256xf32>
    %40 = vector.broadcast %39 : vector<1x256xf32> to vector<8x256xf32>
    %41 = arith.mulf %38, %40 : vector<8x256xf32>
    %c48 = arith.constant 48 : index
    %c0_17 = arith.constant 0 : index
    %42 = vector.load %arg10[%c48, %c0_17] : memref<72x256xf32, #tpu.memory_space<vmem>>, vector<8x256xf32>
    tpu.vector_store %arg10[%c48, %c0_17], %41 {strides = array<i32>} : memref<72x256xf32, #tpu.memory_space<vmem>>, vector<8x256xf32>,
    %c240_i32 = arith.constant 240 : i32
    %43 = tpu.dynamic_rotate %8 by %c240_i32 dim 1 : vector<8x256xf32>, i32 -> vector<8x256xf32>
    %44 = vector.extract_strided_slice %11 {offsets = [6, 0], sizes = [1, 256], strides = [1, 1]} : vector<8x256xf32> to vector<1x256xf32>
    %45 = vector.broadcast %44 : vector<1x256xf32> to vector<8x256xf32>
    %46 = arith.mulf %43, %45 : vector<8x256xf32>
    %c56 = arith.constant 56 : index
    %c0_18 = arith.constant 0 : index
    %47 = vector.load %arg10[%c56, %c0_18] : memref<72x256xf32, #tpu.memory_space<vmem>>, vector<8x256xf32>
    tpu.vector_store %arg10[%c56, %c0_18], %46 {strides = array<i32>} : memref<72x256xf32, #tpu.memory_space<vmem>>, vector<8x256xf32>,
    %c239_i32 = arith.constant 239 : i32
    %48 = tpu.dynamic_rotate %8 by %c239_i32 dim 1 : vector<8x256xf32>, i32 -> vector<8x256xf32>
    %49 = vector.extract_strided_slice %11 {offsets = [7, 0], sizes = [1, 256], strides = [1, 1]} : vector<8x256xf32> to vector<1x256xf32>
    %50 = vector.broadcast %49 : vector<1x256xf32> to vector<8x256xf32>
    %51 = arith.mulf %48, %50 : vector<8x256xf32>
    %c64 = arith.constant 64 : index
    %c0_19 = arith.constant 0 : index
    %52 = vector.load %arg10[%c64, %c0_19] : memref<72x256xf32, #tpu.memory_space<vmem>>, vector<8x256xf32>
    tpu.vector_store %arg10[%c64, %c0_19], %51 {strides = array<i32>} : memref<72x256xf32, #tpu.memory_space<vmem>>, vector<8x256xf32>,
    %c0_20 = arith.constant 0 : index
    %c0_21 = arith.constant 0 : index
    %53 = vector.load %arg5[%c0_20, %c0_21] : memref<10x72xf32, #tpu.memory_space<vmem>>, vector<10x72xf32>
    %c0_22 = arith.constant 0 : index
    %c0_23 = arith.constant 0 : index
    %54 = vector.load %arg10[%c0_22, %c0_23] : memref<72x256xf32, #tpu.memory_space<vmem>>, vector<72x256xf32>
    %cst_24 = arith.constant dense<0.000000e+00> : vector<10x256xf32>
    %55 = tpu.matmul %53, %54, %cst_24 {dimension_numbers = #tpu.dot_dimension_numbers<[1], [0], [0], [1], [0, 0, 1, 1], [], []>} : vector<10x72xf32>, vector<72x256xf32>, vector<10x256xf32> -> vector<10x256xf32>
    %c0_25 = arith.constant 0 : index
    %c0_26 = arith.constant 0 : index
    %56 = vector.load %arg6[%c0_25, %c0_26] : memref<10x1xf32, #tpu.memory_space<vmem>>, vector<10x1xf32>
    %57 = vector.broadcast %56 : vector<10x1xf32> to vector<10x256xf32>
    %58 = arith.addf %55, %57 : vector<10x256xf32>
    %59 = vector.extract_strided_slice %58 {offsets = [0, 0], sizes = [8, 256], strides = [1, 1]} : vector<10x256xf32> to vector<8x256xf32>
    %cst_27 = arith.constant 0.000000e+00 : f32
    %60 = vector.broadcast %cst_27 : f32 to vector<8x256xf32>
    %61 = arith.maximumf %59, %60 : vector<8x256xf32>
    %62 = vector.extract_strided_slice %58 {offsets = [8, 0], sizes = [2, 256], strides = [1, 1]} : vector<10x256xf32> to vector<2x256xf32>
    %c1 = arith.constant 1 : index
    %c0_28 = arith.constant 0 : index
    %63 = vector.load %arg9[%c1, %c0_28] : memref<4x256xf32, #tpu.memory_space<vmem>>, vector<2x256xf32>
    tpu.vector_store %arg9[%c1, %c0_28], %62 {strides = array<i32>} : memref<4x256xf32, #tpu.memory_space<vmem>>, vector<2x256xf32>,
    %c0_29 = arith.constant 0 : index
    %c0_30 = arith.constant 0 : index
    %64 = vector.load %arg7[%c0_29, %c0_30] : memref<8x1xf32, #tpu.memory_space<vmem>>, vector<8x1xf32>
    %65 = vector.broadcast %64 : vector<8x1xf32> to vector<8x256xf32>
    %66 = arith.mulf %61, %65 : vector<8x256xf32>
    %cst_31 = arith.constant dense<0.000000e+00> : vector<256xf32>
    %67 = vector.multi_reduction <add>, %66, %cst_31 [0] : vector<8x256xf32> to vector<256xf32>
    %68 = vector.shape_cast %67 : vector<256xf32> to vector<1x256xf32>
    %c0_32 = arith.constant 0 : index
    %c0_33 = arith.constant 0 : index
    %69 = vector.load %arg8[%c0_32, %c0_33] : memref<1x1xf32, #tpu.memory_space<vmem>>, vector<1x1xf32>
    %70 = vector.broadcast %69 : vector<1x1xf32> to vector<1x256xf32>
    %71 = arith.addf %68, %70 : vector<1x256xf32>
    %c3 = arith.constant 3 : index
    %c0_34 = arith.constant 0 : index
    %72 = vector.load %arg9[%c3, %c0_34] : memref<4x256xf32, #tpu.memory_space<vmem>>, vector<1x256xf32>
    tpu.vector_store %arg9[%c3, %c0_34], %71 {strides = array<i32>} : memref<4x256xf32, #tpu.memory_space<vmem>>, vector<1x256xf32>,
    return
  }
  func.func @transform_0(%arg0: i32) -> (i32, i32) {
    %c0_i32 = arith.constant 0 : i32
    %c0_i32_0 = arith.constant 0 : i32
    return %c0_i32, %arg0 : i32, i32
  }
  func.func @transform_1(%arg0: i32) -> (i32, i32) {
    %c0_i32 = arith.constant 0 : i32
    %c0_i32_0 = arith.constant 0 : i32
    %c0_i32_1 = arith.constant 0 : i32
    return %c0_i32, %c0_i32_0 : i32, i32
  }
  func.func @transform_2(%arg0: i32) -> (i32, i32) {
    %c0_i32 = arith.constant 0 : i32
    %c0_i32_0 = arith.constant 0 : i32
    %c0_i32_1 = arith.constant 0 : i32
    return %c0_i32, %c0_i32_0 : i32, i32
  }
  func.func @transform_3(%arg0: i32) -> (i32, i32) {
    %c0_i32 = arith.constant 0 : i32
    %c0_i32_0 = arith.constant 0 : i32
    %c0_i32_1 = arith.constant 0 : i32
    return %c0_i32, %c0_i32_0 : i32, i32
  }
  func.func @transform_4(%arg0: i32) -> (i32, i32) {
    %c0_i32 = arith.constant 0 : i32
    %c0_i32_0 = arith.constant 0 : i32
    %c0_i32_1 = arith.constant 0 : i32
    return %c0_i32, %c0_i32_0 : i32, i32
  }
  func.func @transform_5(%arg0: i32) -> (i32, i32) {
    %c0_i32 = arith.constant 0 : i32
    %c0_i32_0 = arith.constant 0 : i32
    %c0_i32_1 = arith.constant 0 : i32
    return %c0_i32, %c0_i32_0 : i32, i32
  }
  func.func @transform_6(%arg0: i32) -> (i32, i32) {
    %c0_i32 = arith.constant 0 : i32
    %c0_i32_0 = arith.constant 0 : i32
    %c0_i32_1 = arith.constant 0 : i32
    return %c0_i32, %c0_i32_0 : i32, i32
  }
  func.func @transform_7(%arg0: i32) -> (i32, i32) {
    %c0_i32 = arith.constant 0 : i32
    %c0_i32_0 = arith.constant 0 : i32
    %c0_i32_1 = arith.constant 0 : i32
    return %c0_i32, %c0_i32_0 : i32, i32
  }
  func.func @transform_8(%arg0: i32) -> (i32, i32) {
    %c0_i32 = arith.constant 0 : i32
    %c0_i32_0 = arith.constant 0 : i32
    return %c0_i32, %arg0 : i32, i32
  }
}

</mosaic_0001>

<llo_original>
// kernel: tpu_custom_call.1
$region0: #{tpu_custom_call.1}
  #allocation0 [shape = 'u32[]', space=smem, size = 0x4, offset = 0x4, fixed_abs, tag = 'smem constant byte address 0x4 - core index']
  #allocation1 [shape = 'u32[144,128]{1,0:T(1,128)}', space=vmem, size = 0x12000, scoped, tag = 'internal scratch']
  #allocation2 [shape = 'f32[72,256]{1,0:T(8,128)}', space=vmem, size = 0x12000, scoped, tag = 'scratch operand']
  #allocation3 [shape = 'f32[1,1]{1,0:T(1,128)S(1)}', space=vmem, size = 0x200, scoped, tag = 'scoped memory for tpu_custom_call.1']
  %s0 = inlined_call_operand.vmem [shape: f32[8,512], index: 0, kind: input, shape index: {}]
  %s1 = inlined_call_operand.vmem [shape: f32[8,256], index: 1, kind: input, shape index: {}]
  %s2 = inlined_call_operand.vmem [shape: f32[9,8], index: 2, kind: input, shape index: {}]
  %s3 = inlined_call_operand.vmem [shape: f32[9,1], index: 3, kind: input, shape index: {}]
  %s4 = inlined_call_operand.vmem [shape: f32[10,72], index: 4, kind: input, shape index: {}]
  %s5 = inlined_call_operand.vmem [shape: f32[10,1], index: 5, kind: input, shape index: {}]
  %s6 = inlined_call_operand.vmem [shape: f32[8,1], index: 6, kind: input, shape index: {}]
  %s7 = inlined_call_operand.<no memory space> [shape: f32[1,1], index: 7, kind: input, shape index: {}]
  %s8 = inlined_call_operand.hbm [shape: f32[4,512], index: 8, kind: output, shape index: {}]
  %s9 = sld [smem:[#allocation0]]
  $region65: #{tpu_custom_call.1} parent=0
    _
  %s11 = ssub.s32 1, %s9
  %s12 = scalar_select 0, %s11, %s9
  %v13 = vstv %s7
  %14 = vst [vmem:[#allocation3] sm:$0x1] %v13
  $region1: #{tpu_custom_call.1} parent=0
    #allocation4 [shape = 'u8[8192]{0}', space=vmem, size = 0x2000, scoped, tag = 'output window, operand 0']
    #allocation5 [shape = 's32[2]{0}', space=sflag, size = 0x8, scoped, tag = 'scoped memory for tpu_custom_call.1']
    %15 = vsyncpa [#allocation5], 0
    %s16 = scalar_lea.sflag [#allocation5], 1
    %17 = vsyncpa %s16, 0
    loop: start=0, step=1, limit=4
    $region2: #{tpu_custom_call.1} parent=1 // loop_pre_header
      _
    $region3: #{tpu_custom_call.1} parent=1 // loop_header
      %s19 = sphi 0, %s23
      %p20 = scmp.ge.s32.totalorder %s19, 4
      %s29 = sphi 0, %s31
      %s32 = sphi 0, %s29
      %s33 = sphi 0, %s32
      %s49 = sphi 0, %s33
      %s53 = sphi 0, %s53
      %s55 = sphi 0, %s53
      %s56 = sphi 0, %s55
      %s70 = sphi 0, %s56
      %s74 = sphi 0, %s74
      %s76 = sphi 0, %s74
      %s77 = sphi 0, %s76
      %s91 = sphi 0, %s77
      %s95 = sphi 0, %s95
      %s97 = sphi 0, %s95
      %s98 = sphi 0, %s97
      %s112 = sphi 0, %s98
      %s116 = sphi 0, %s116
      %s118 = sphi 0, %s116
      %s119 = sphi 0, %s118
      %s133 = sphi 0, %s119
      %s137 = sphi 0, %s137
      %s139 = sphi 0, %s137
      %s140 = sphi 0, %s139
      %s154 = sphi 0, %s140
      %s158 = sphi 0, %s158
      %s160 = sphi 0, %s158
      %s161 = sphi 0, %s160
      %s175 = sphi 0, %s161
      %s179 = sphi 0, %s179
      %s181 = sphi 0, %s179
      %s182 = sphi 0, %s181
      %s196 = sphi 0, %s182
      %s202 = sphi 0, %s204
      %s205 = sphi 0, %s202
      %s206 = sphi 0, %s205
      %s222 = sphi 0, %s206
    $region4: #{tpu_custom_call.1} parent=1 // loop_header_branch
      %22 = sbr.rel (%p20) target = $region8
    $region5: #{tpu_custom_call.1} parent=1 // loop_body
      %s24 = ssub.s32 %s19, 1
      %s25 = ssub.s32 %s19, 2
      %s26 = sadd.s32 %s19, 1
      %s27 = ssub.s32 %s19, %s26
      %p28 = scmp.eq.s32.totalorder %s27, 0
      %s30 = sadd.s32 %s29, 1
      %s31 = scalar_select %p28, %s29, %s30
      %p34 = pneg %p28
      %p35 = scmp.eq.s32.totalorder %s19, 1
      %p36 = por %p34, %p35
      %p37 = scmp.ne.s32.totalorder %s29, %s32
      %p38 = scmp.eq.s32.totalorder %s19, 0
      %p39 = por %p37, %p38
      %p40 = scmp.ne.s32.totalorder %s29, %s32
      %p41 = scmp.eq.s32.totalorder %s24, 1
      %p42 = por %p40, %p41
      %p43 = scmp.ne.s32.totalorder %s32, %s33
      %p44 = scmp.eq.s32.totalorder %s24, 0
      %p45 = por %p43, %p44
      %p46 = scmp.ne.s32.totalorder %s32, %s33
      %p47 = scmp.eq.s32.totalorder %s25, 1
      %p48 = por %p46, %p47
      %p50 = scmp.ne.s32.totalorder %s33, %s49
      %p51 = scmp.eq.s32.totalorder %s25, 0
      %p52 = por %p50, %p51
      %s54 = sadd.s32 %s53, 1
      %p57 = scmp.eq.s32.totalorder %s19, 1
      %p58 = scmp.ne.s32.totalorder %s53, %s55
      %p59 = scmp.eq.s32.totalorder %s19, 0
      %p60 = por %p58, %p59
      %p61 = scmp.ne.s32.totalorder %s53, %s55
      %p62 = scmp.eq.s32.totalorder %s24, 1
      %p63 = por %p61, %p62
      %p64 = scmp.ne.s32.totalorder %s55, %s56
      %p65 = scmp.eq.s32.totalorder %s24, 0
      %p66 = por %p64, %p65
      %p67 = scmp.ne.s32.totalorder %s55, %s56
      %p68 = scmp.eq.s32.totalorder %s25, 1
      %p69 = por %p67, %p68
      %p71 = scmp.ne.s32.totalorder %s56, %s70
      %p72 = scmp.eq.s32.totalorder %s25, 0
      %p73 = por %p71, %p72
      %s75 = sadd.s32 %s74, 1
      %p78 = scmp.eq.s32.totalorder %s19, 1
      %p79 = scmp.ne.s32.totalorder %s74, %s76
      %p80 = scmp.eq.s32.totalorder %s19, 0
      %p81 = por %p79, %p80
      %p82 = scmp.ne.s32.totalorder %s74, %s76
      %p83 = scmp.eq.s32.totalorder %s24, 1
      %p84 = por %p82, %p83
      %p85 = scmp.ne.s32.totalorder %s76, %s77
      %p86 = scmp.eq.s32.totalorder %s24, 0
      %p87 = por %p85, %p86
      %p88 = scmp.ne.s32.totalorder %s76, %s77
      %p89 = scmp.eq.s32.totalorder %s25, 1
      %p90 = por %p88, %p89
      %p92 = scmp.ne.s32.totalorder %s77, %s91
      %p93 = scmp.eq.s32.totalorder %s25, 0
      %p94 = por %p92, %p93
      %s96 = sadd.s32 %s95, 1
      %p99 = scmp.eq.s32.totalorder %s19, 1
      %p100 = scmp.ne.s32.totalorder %s95, %s97
      %p101 = scmp.eq.s32.totalorder %s19, 0
      %p102 = por %p100, %p101
      %p103 = scmp.ne.s32.totalorder %s95, %s97
      %p104 = scmp.eq.s32.totalorder %s24, 1
      %p105 = por %p103, %p104
      %p106 = scmp.ne.s32.totalorder %s97, %s98
      %p107 = scmp.eq.s32.totalorder %s24, 0
      %p108 = por %p106, %p107
      %p109 = scmp.ne.s32.totalorder %s97, %s98
      %p110 = scmp.eq.s32.totalorder %s25, 1
      %p111 = por %p109, %p110
      %p113 = scmp.ne.s32.totalorder %s98, %s112
      %p114 = scmp.eq.s32.totalorder %s25, 0
      %p115 = por %p113, %p114
      %s117 = sadd.s32 %s116, 1
      %p120 = scmp.eq.s32.totalorder %s19, 1
      %p121 = scmp.ne.s32.totalorder %s116, %s118
      %p122 = scmp.eq.s32.totalorder %s19, 0
      %p123 = por %p121, %p122
      %p124 = scmp.ne.s32.totalorder %s116, %s118
      %p125 = scmp.eq.s32.totalorder %s24, 1
      %p126 = por %p124, %p125
      %p127 = scmp.ne.s32.totalorder %s118, %s119
      %p128 = scmp.eq.s32.totalorder %s24, 0
      %p129 = por %p127, %p128
      %p130 = scmp.ne.s32.totalorder %s118, %s119
      %p131 = scmp.eq.s32.totalorder %s25, 1
      %p132 = por %p130, %p131
      %p134 = scmp.ne.s32.totalorder %s119, %s133
      %p135 = scmp.eq.s32.totalorder %s25, 0
      %p136 = por %p134, %p135
      %s138 = sadd.s32 %s137, 1
      %p141 = scmp.eq.s32.totalorder %s19, 1
      %p142 = scmp.ne.s32.totalorder %s137, %s139
      %p143 = scmp.eq.s32.totalorder %s19, 0
      %p144 = por %p142, %p143
      %p145 = scmp.ne.s32.totalorder %s137, %s139
      %p146 = scmp.eq.s32.totalorder %s24, 1
      %p147 = por %p145, %p146
      %p148 = scmp.ne.s32.totalorder %s139, %s140
      %p149 = scmp.eq.s32.totalorder %s24, 0
      %p150 = por %p148, %p149
      %p151 = scmp.ne.s32.totalorder %s139, %s140
      %p152 = scmp.eq.s32.totalorder %s25, 1
      %p153 = por %p151, %p152
      %p155 = scmp.ne.s32.totalorder %s140, %s154
      %p156 = scmp.eq.s32.totalorder %s25, 0
      %p157 = por %p155, %p156
      %s159 = sadd.s32 %s158, 1
      %p162 = scmp.eq.s32.totalorder %s19, 1
      %p163 = scmp.ne.s32.totalorder %s158, %s160
      %p164 = scmp.eq.s32.totalorder %s19, 0
      %p165 = por %p163, %p164
      %p166 = scmp.ne.s32.totalorder %s158, %s160
      %p167 = scmp.eq.s32.totalorder %s24, 1
      %p168 = por %p166, %p167
      %p169 = scmp.ne.s32.totalorder %s160, %s161
      %p170 = scmp.eq.s32.totalorder %s24, 0
      %p171 = por %p169, %p170
      %p172 = scmp.ne.s32.totalorder %s160, %s161
      %p173 = scmp.eq.s32.totalorder %s25, 1
      %p174 = por %p172, %p173
      %p176 = scmp.ne.s32.totalorder %s161, %s175
      %p177 = scmp.eq.s32.totalorder %s25, 0
      %p178 = por %p176, %p177
      %s180 = sadd.s32 %s179, 1
      %p183 = scmp.eq.s32.totalorder %s19, 1
      %p184 = scmp.ne.s32.totalorder %s179, %s181
      %p185 = scmp.eq.s32.totalorder %s19, 0
      %p186 = por %p184, %p185
      %p187 = scmp.ne.s32.totalorder %s179, %s181
      %p188 = scmp.eq.s32.totalorder %s24, 1
      %p189 = por %p187, %p188
      %p190 = scmp.ne.s32.totalorder %s181, %s182
      %p191 = scmp.eq.s32.totalorder %s24, 0
      %p192 = por %p190, %p191
      %p193 = scmp.ne.s32.totalorder %s181, %s182
      %p194 = scmp.eq.s32.totalorder %s25, 1
      %p195 = por %p193, %p194
      %p197 = scmp.ne.s32.totalorder %s182, %s196
      %p198 = scmp.eq.s32.totalorder %s25, 0
      %p199 = por %p197, %p198
      %s200 = ssub.s32 %s19, %s26
      %p201 = scmp.eq.s32.totalorder %s200, 0
      %s203 = sadd.s32 %s202, 1
      %s204 = scalar_select %p201, %s202, %s203
      %p207 = pneg %p201
      %p208 = scmp.eq.s32.totalorder %s19, 1
      %p209 = por %p207, %p208
      %p210 = scmp.ne.s32.totalorder %s202, %s205
      %p211 = scmp.eq.s32.totalorder %s19, 0
      %p212 = por %p210, %p211
      %p213 = scmp.ne.s32.totalorder %s202, %s205
      %p214 = scmp.eq.s32.totalorder %s24, 1
      %p215 = por %p213, %p214
      %p216 = scmp.ne.s32.totalorder %s205, %s206
      %p217 = scmp.eq.s32.totalorder %s24, 0
      %p218 = por %p216, %p217
      %p219 = scmp.ne.s32.totalorder %s205, %s206
      %p220 = scmp.eq.s32.totalorder %s25, 1
      %p221 = por %p219, %p220
      %p223 = scmp.ne.s32.totalorder %s206, %s222
      %p224 = scmp.eq.s32.totalorder %s25, 0
      %p225 = por %p223, %p224
      %p226 = scmp.le.s32.totalorder 1, %s19
      %p227 = scmp.lt.s32.totalorder %s19, 3
      %p228 = pnand %p226, %p227
      %p229 = pneg %p228
      // Predicated region
      $region9: #{tpu_custom_call.1} parent=5 // pred_check
        _
      $region10: #{tpu_custom_call.1} parent=5 // pred_check_branch
        %231 = sbr.rel (%p228) target = $region12
      $region11: #{tpu_custom_call.1} parent=5 // pred_region
        %s232 = ssub.s32 %s19, 1
        // Predicated region
        $region13: #{tpu_custom_call.1} parent=11 // pred_check
          %p233 = pneg %p66
        $region14: #{tpu_custom_call.1} parent=11 // pred_check_branch
          %235 = sbr.rel (%p233) target = $region16
        $region15: #{tpu_custom_call.1} parent=11 // pred_region
          _
        $region16: #{tpu_custom_call.1} parent=11 // pred_fallthru
          _
        // Predicated region
        $region17: #{tpu_custom_call.1} parent=11 // pred_check
          %p236 = pneg %p87
        $region18: #{tpu_custom_call.1} parent=11 // pred_check_branch
          %238 = sbr.rel (%p236) target = $region20
        $region19: #{tpu_custom_call.1} parent=11 // pred_region
          _
        $region20: #{tpu_custom_call.1} parent=11 // pred_fallthru
          _
        // Predicated region
        $region21: #{tpu_custom_call.1} parent=11 // pred_check
          %p239 = pneg %p108
        $region22: #{tpu_custom_call.1} parent=11 // pred_check_branch
          %241 = sbr.rel (%p239) target = $region24
        $region23: #{tpu_custom_call.1} parent=11 // pred_region
          _
        $region24: #{tpu_custom_call.1} parent=11 // pred_fallthru
          _
        // Predicated region
        $region25: #{tpu_custom_call.1} parent=11 // pred_check
          %p242 = pneg %p129
        $region26: #{tpu_custom_call.1} parent=11 // pred_check_branch
          %244 = sbr.rel (%p242) target = $region28
        $region27: #{tpu_custom_call.1} parent=11 // pred_region
          _
        $region28: #{tpu_custom_call.1} parent=11 // pred_fallthru
          _
        // Predicated region
        $region29: #{tpu_custom_call.1} parent=11 // pred_check
          %p245 = pneg %p150
        $region30: #{tpu_custom_call.1} parent=11 // pred_check_branch
          %247 = sbr.rel (%p245) target = $region32
        $region31: #{tpu_custom_call.1} parent=11 // pred_region
          _
        $region32: #{tpu_custom_call.1} parent=11 // pred_fallthru
          _
        // Predicated region
        $region33: #{tpu_custom_call.1} parent=11 // pred_check
          %p248 = pneg %p171
        $region34: #{tpu_custom_call.1} parent=11 // pred_check_branch
          %250 = sbr.rel (%p248) target = $region36
        $region35: #{tpu_custom_call.1} parent=11 // pred_region
          _
        $region36: #{tpu_custom_call.1} parent=11 // pred_fallthru
          _
        // Predicated region
        $region37: #{tpu_custom_call.1} parent=11 // pred_check
          %p251 = pneg %p192
        $region38: #{tpu_custom_call.1} parent=11 // pred_check_branch
          %253 = sbr.rel (%p251) target = $region40
        $region39: #{tpu_custom_call.1} parent=11 // pred_region
          _
        $region40: #{tpu_custom_call.1} parent=11 // pred_fallthru
          _
      $region12: #{tpu_custom_call.1} parent=5 // pred_fallthru
        _
      %p254 = scmp.lt.s32.totalorder %s19, 2
      // Predicated region
      $region41: #{tpu_custom_call.1} parent=5 // pred_check
        %p255 = pneg %p254
      $region42: #{tpu_custom_call.1} parent=5 // pred_check_branch
        %257 = sbr.rel (%p255) target = $region44
      $region43: #{tpu_custom_call.1} parent=5 // pred_region
        // Predicated region
        $region45: #{tpu_custom_call.1} parent=43 // pred_check
          %p258 = pneg %p39
        $region46: #{tpu_custom_call.1} parent=43 // pred_check_branch
          %260 = sbr.rel (%p258) target = $region48
        $region47: #{tpu_custom_call.1} parent=43 // pred_region
          %s261 = smul.u32 2, %s19
          %p262 = scmp.lt.s32.totalorder %s261, 3
          %s263 = scalar_select %p262, %s261, 3
          %s264 = smul.addr %s263, 8
          %s265 = scalar_lea.vmem %s0, %s264
          %s266 = smul.u32 2, %s19
        $region48: #{tpu_custom_call.1} parent=43 // pred_fallthru
          _
      $region44: #{tpu_custom_call.1} parent=5 // pred_fallthru
        _
      %p267 = scmp.le.s32.totalorder 1, %s19
      %p268 = scmp.lt.s32.totalorder %s19, 3
      %p269 = pnand %p267, %p268
      %p270 = pneg %p269
      // Predicated region
      $region49: #{tpu_custom_call.1} parent=5 // pred_check
        _
      $region50: #{tpu_custom_call.1} parent=5 // pred_check_branch
        %272 = sbr.rel (%p269) target = $region52
      $region51: #{tpu_custom_call.1} parent=5 // pred_region
        %s273 = ssub.s32 %s19, 1
        %s274 = smul.u32 2, %s24
        %p275 = scmp.lt.s32.totalorder %s274, 3
        %s276 = scalar_select %p275, %s274, 3
        %s277 = smul.addr %s276, 8
        %s278 = scalar_lea.vmem %s0, %s277
        %p279 = pneg %p45
        %p280 = pneg %p42
        %p281 = pneg %p66
        %p282 = pneg %p63
        %p283 = pneg %p87
        %p284 = pneg %p84
        %p285 = pneg %p108
        %p286 = pneg %p105
        %p287 = pneg %p129
        %p288 = pneg %p126
        %p289 = pneg %p150
        %p290 = pneg %p147
        %p291 = pneg %p171
        %p292 = pneg %p168
        %p293 = pneg %p192
        %p294 = pneg %p189
        %p295 = pneg %p218
        %p296 = pneg %p215
        %s297 = sand.u32 %s205, 1
        %s298 = scalar_lea.sflag [#allocation5], %s297
        %s299 = sand.u32 %s205, 1
        %s300 = smul.addr %s299, 8
        %s301 = scalar_lea.vmem [#allocation4], %s300
        %s302 = smul.u32 2, %s24
        %p303 = scmp.lt.s32.totalorder %s302, 3
        %s304 = scalar_select %p303, %s302, 3
        %s305 = smul.addr %s304, 8
        %s306 = scalar_lea.vmem %s0, %s305
        %s307 = smul.u32 2, %s24
        %s308 = smul.u32 2, %s24
        %v309 = vld [vmem:[%s306] sm:$0xff]
        %v310 = vld [vmem:[%s306 + $0x8] sm:$0xff]
        %v311 = vld [vmem:[%s2] sm:$0xff]
        %v312 = vld [vmem:[%s2 + $0x8] sm:$0x1]
        %v313 = vld [vmem:[%s3] sm:$0xff]
        %v314 = vld [vmem:[%s3 + $0x8] sm:$0x1]
        %316 = vset.pattern.permute.xlu0 0
        %317 = vperm.xlu0 %316, %v313
        %v318 = vpop.permute.xlu0 %317
        %321 = vset.pattern.permute.xlu0 0
        %322 = vperm.xlu0 %321, %v314
        %v323 = vpop.permute.xlu0 %322
        %vm325 = vcmask 64512
        %v327 = vsel %vm325, %v311, 0
        %v330 = vsel %vm325, %v312, 0
        %332 = vmatprep.subr.mxu0 %v310
        %333 = vmatpush1.msra.mxu0 %v309
        %334 = vmatprep.subr.mxu0 0.0
        %335 = vmatpush1.msra.mxu0 0.0
        %336 = vmatprep.subr.mxu0 0.0
        %337 = vmatpush1.msra.mxu0 0.0
        %338 = vmatprep.subr.mxu0 0.0
        %339 = vmatpush1.msra.mxu0 0.0
        %340 = vmatprep.subr.mxu0 0.0
        %341 = vmatpush1.msra.mxu0 0.0
        %342 = vmatprep.subr.mxu0 0.0
        %343 = vmatpush1.msra.mxu0 0.0
        %344 = vmatprep.subr.mxu0 0.0
        %345 = vmatpush1.msra.mxu0 0.0
        %346 = vmatprep.subr.mxu0 0.0
        %347 = vmatpush1.msra.mxu0 0.0
        %348 = vmatprep.subr.mxu0 0.0
        %349 = vmatpush1.msra.mxu0 0.0
        %350 = vmatprep.subr.mxu0 0.0
        %351 = vmatpush1.msra.mxu0 0.0
        %352 = vmatprep.subr.mxu0 0.0
        %353 = vmatpush1.msra.mxu0 0.0
        %354 = vmatprep.subr.mxu0 0.0
        %355 = vmatpush1.msra.mxu0 0.0
        %356 = vmatprep.subr.mxu0 0.0
        %357 = vmatpush1.msra.mxu0 0.0
        %358 = vmatprep.subr.mxu0 0.0
        %359 = vmatpush1.msra.mxu0 0.0
        %360 = vmatprep.subr.mxu0 0.0
        %361 = vmatpush1.msra.mxu0 0.0
        %362 = vmatprep.subr.mxu0 0.0
        %363 = vmatpush1.msra.mxu0 0.0
        %364 = vmatprep.subr.mxu0 0.0
        %365 = vmatpush1.msra.mxu0 0.0
        %366 = vmatprep.subr.mxu0 0.0
        %367 = vmatpush1.msra.mxu0 0.0
        %368 = vmatprep.subr.mxu0 0.0
        %369 = vmatpush1.msra.mxu0 0.0
        %370 = vmatprep.subr.mxu0 0.0
        %371 = vmatpush1.msra.mxu0 0.0
        %372 = vmatprep.subr.mxu0 0.0
        %373 = vmatpush1.msra.mxu0 0.0
        %374 = vmatprep.subr.mxu0 0.0
        %375 = vmatpush1.msra.mxu0 0.0
        %376 = vmatprep.subr.mxu0 0.0
        %377 = vmatpush1.msra.mxu0 0.0
        %378 = vmatprep.subr.mxu0 0.0
        %379 = vmatpush1.msra.mxu0 0.0
        %380 = vmatprep.subr.mxu0 0.0
        %381 = vmatpush1.msra.mxu0 0.0
        %382 = vmatprep.subr.mxu0 0.0
        %383 = vmatpush1.msra.mxu0 0.0
        %384 = vmatprep.subr.mxu0 0.0
        %385 = vmatpush1.msra.mxu0 0.0
        %386 = vmatprep.subr.mxu0 0.0
        %387 = vmatpush1.msra.mxu0 0.0
        %388 = vmatprep.subr.mxu0 0.0
        %389 = vmatpush1.msra.mxu0 0.0
        %390 = vmatprep.subr.mxu0 0.0
        %391 = vmatpush1.msra.mxu0 0.0
        %392 = vmatprep.subr.mxu0 0.0
        %393 = vmatpush1.msra.mxu0 0.0
        %394 = vmatprep.subr.mxu0 0.0
        %395 = vmatpush1.msra.mxu0 0.0
        %396 = vmatprep.mubr.f32.mxu0 0.0
        %397 = vmatmul.mubr.f32.gmra.mrb[0].mxu0 %v327
        %v398 = vpop.f32.mrb[0].mxu0
        %v399 = vadd.f32 %v318, %v398
        %v400 = vpop.f32.mrb[0].mxu0
        %v401 = vadd.f32 %v318, %v400
        %402 = vmatprep.mubr.f32.mxu0 0.0
        %403 = vmatmul.mubr.f32.gmra.mrb[0].mxu0 %v330
        %v404 = vpop.f32.mrb[0].mxu0
        %v405 = vadd.f32 %v323, %v404
        %v406 = vpop.f32.mrb[0].mxu0
        %v407 = vadd.f32 %v323, %v406
        %408 = vdwg.mxu0
        %v409 = vmax.f32 %v399, 0.0
        %v410 = vmax.f32 %v401, 0.0
        %v413 = vcombine.low %v405, %v407
        %v415 = vunpack.c.l.s4 1966171168
        %v416 = vunpack.c.0.s8 %v415
        %v417 = vlaneseq
        %v418 = vshrl.u32 %v417, 7
        %v419 = vsub.s32 %v416, %v418
        %v420 = vrot.slane %v413, %v419
        %v422 = vunpack.c.l.s4 1966171168
        %v423 = vunpack.c.0.s8 %v422
        %v424 = vlaneseq
        %v425 = vshrl.u32 %v424, 7
        %v426 = vsub.s32 %v423, %v425
        %v427 = vrot.slane %v420, %v426
        %v429 = vlaneseq
        %vm430 = vcmp.ge.s32.totalorder %v429, 0
        %vm431 = vcmp.lt.s32.totalorder %v429, 256
        %vm432 = vmand %vm430, %vm431
        %433 = vst.msk [vmem:[%s301] ss:$4 sm:$0x3] %vm432, %v427
        %v434 = vld [vmem:[%s1] sm:$0xff]
        %v435 = vld [vmem:[%s1 + $0x8] sm:$0xff]
        %436 = vrot.lane.b32.xlu0 %v409, 17
        %v437 = vpop.permute.xlu0 %436
        %438 = vrot.lane.b32.xlu0 %v410, 17
        %v439 = vpop.permute.xlu0 %438
        %v440 = vlaneseq
        %v441 = vand.u32 %v440, 127
        %vm442 = vcmp.lt.s32.totalorder %v441, 17
        %v443 = vsel %vm442, %v437, %v439
        %v444 = vsel %vm442, %v439, %v437
        %v445 = vlaneseq
        %v446 = vshrl.u32 %v445, 7
        %v447 = vsub.s32 0, %v446
        %v448 = vrot.slane %v434, %v447
        %v449 = vlaneseq
        %v450 = vshrl.u32 %v449, 7
        %v451 = vsub.s32 0, %v450
        %v452 = vrot.slane %v435, %v451
        %v453 = vmul.f32 %v444, %v448
        %v454 = vmul.f32 %v443, %v452
        %455 = vst [vmem:[#allocation2] sm:$0xff] %v453
        %456 = vst [vmem:[#allocation2 + $0x8] sm:$0xff] %v454
        %457 = vrot.lane.b32.xlu0 %v409, 16
        %v458 = vpop.permute.xlu0 %457
        %459 = vrot.lane.b32.xlu0 %v410, 16
        %v460 = vpop.permute.xlu0 %459
        %vm461 = vcmp.lt.s32.totalorder %v441, 16
        %v462 = vsel %vm461, %v458, %v460
        %v463 = vsel %vm461, %v460, %v458
        %v464 = vlaneseq
        %v465 = vshrl.u32 %v464, 7
        %v466 = vsub.s32 1, %v465
        %v467 = vrot.slane %v434, %v466
        %v468 = vlaneseq
        %v469 = vshrl.u32 %v468, 7
        %v470 = vsub.s32 1, %v469
        %v471 = vrot.slane %v435, %v470
        %v472 = vmul.f32 %v463, %v467
        %v473 = vmul.f32 %v462, %v471
        %474 = vst [vmem:[#allocation2 + $0x10] sm:$0xff] %v472
        %475 = vst [vmem:[#allocation2 + $0x18] sm:$0xff] %v473
        %476 = vrot.lane.b32.xlu0 %v409, 15
        %v477 = vpop.permute.xlu0 %476
        %478 = vrot.lane.b32.xlu0 %v410, 15
        %v479 = vpop.permute.xlu0 %478
        %vm480 = vcmp.lt.s32.totalorder %v441, 15
        %v481 = vsel %vm480, %v477, %v479
        %v482 = vsel %vm480, %v479, %v477
        %v483 = vlaneseq
        %v484 = vshrl.u32 %v483, 7
        %v485 = vsub.s32 2, %v484
        %v486 = vrot.slane %v434, %v485
        %v487 = vlaneseq
        %v488 = vshrl.u32 %v487, 7
        %v489 = vsub.s32 2, %v488
        %v490 = vrot.slane %v435, %v489
        %v491 = vmul.f32 %v482, %v486
        %v492 = vmul.f32 %v481, %v490
        %493 = vst [vmem:[#allocation2 + $0x20] sm:$0xff] %v491
        %494 = vst [vmem:[#allocation2 + $0x28] sm:$0xff] %v492
        %495 = vrot.lane.b32.xlu0 %v409, 1
        %v496 = vpop.permute.xlu0 %495
        %497 = vrot.lane.b32.xlu0 %v410, 1
        %v498 = vpop.permute.xlu0 %497
        %vm499 = vcmp.lt.s32.totalorder %v441, 1
        %v500 = vsel %vm499, %v496, %v498
        %v501 = vsel %vm499, %v498, %v496
        %v502 = vlaneseq
        %v503 = vshrl.u32 %v502, 7
        %v504 = vsub.s32 3, %v503
        %v505 = vrot.slane %v434, %v504
        %v506 = vlaneseq
        %v507 = vshrl.u32 %v506, 7
        %v508 = vsub.s32 3, %v507
        %v509 = vrot.slane %v435, %v508
        %v510 = vmul.f32 %v501, %v505
        %v511 = vmul.f32 %v500, %v509
        %512 = vst [vmem:[#allocation2 + $0x30] sm:$0xff] %v510
        %513 = vst [vmem:[#allocation2 + $0x38] sm:$0xff] %v511
        %514 = vst [vmem:[#allocation2 + $0x40] sm:$0xff] %v409
        %515 = vst [vmem:[#allocation2 + $0x48] sm:$0xff] %v410
        %516 = vrot.lane.b32.xlu0 %v409, 127
        %v517 = vpop.permute.xlu0 %516
        %518 = vrot.lane.b32.xlu0 %v410, 127
        %v519 = vpop.permute.xlu0 %518
        %vm520 = vcmp.lt.s32.totalorder %v441, 127
        %v521 = vsel %vm520, %v517, %v519
        %v522 = vsel %vm520, %v519, %v517
        %v523 = vlaneseq
        %v524 = vshrl.u32 %v523, 7
        %v525 = vsub.s32 4, %v524
        %v526 = vrot.slane %v434, %v525
        %v527 = vlaneseq
        %v528 = vshrl.u32 %v527, 7
        %v529 = vsub.s32 4, %v528
        %v530 = vrot.slane %v435, %v529
        %v531 = vmul.f32 %v521, %v526
        %v532 = vmul.f32 %v522, %v530
        %533 = vst [vmem:[#allocation2 + $0x50] sm:$0xff] %v531
        %534 = vst [vmem:[#allocation2 + $0x58] sm:$0xff] %v532
        %535 = vrot.lane.b32.xlu0 %v409, 113
        %v536 = vpop.permute.xlu0 %535
        %537 = vrot.lane.b32.xlu0 %v410, 113
        %v538 = vpop.permute.xlu0 %537
        %vm539 = vcmp.lt.s32.totalorder %v441, 113
        %v540 = vsel %vm539, %v536, %v538
        %v541 = vsel %vm539, %v538, %v536
        %v542 = vlaneseq
        %v543 = vshrl.u32 %v542, 7
        %v544 = vsub.s32 5, %v543
        %v545 = vrot.slane %v434, %v544
        %v546 = vlaneseq
        %v547 = vshrl.u32 %v546, 7
        %v548 = vsub.s32 5, %v547
        %v549 = vrot.slane %v435, %v548
        %v550 = vmul.f32 %v540, %v545
        %v551 = vmul.f32 %v541, %v549
        %552 = vst [vmem:[#allocation2 + $0x60] sm:$0xff] %v550
        %553 = vst [vmem:[#allocation2 + $0x68] sm:$0xff] %v551
        %554 = vrot.lane.b32.xlu0 %v409, 112
        %v555 = vpop.permute.xlu0 %554
        %556 = vrot.lane.b32.xlu0 %v410, 112
        %v557 = vpop.permute.xlu0 %556
        %vm558 = vcmp.lt.s32.totalorder %v441, 112
        %v559 = vsel %vm558, %v555, %v557
        %v560 = vsel %vm558, %v557, %v555
        %v561 = vlaneseq
        %v562 = vshrl.u32 %v561, 7
        %v563 = vsub.s32 6, %v562
        %v564 = vrot.slane %v434, %v563
        %v565 = vlaneseq
        %v566 = vshrl.u32 %v565, 7
        %v567 = vsub.s32 6, %v566
        %v568 = vrot.slane %v435, %v567
        %v569 = vmul.f32 %v559, %v564
        %v570 = vmul.f32 %v560, %v568
        %571 = vst [vmem:[#allocation2 + $0x70] sm:$0xff] %v569
        %572 = vst [vmem:[#allocation2 + $0x78] sm:$0xff] %v570
        %573 = vrot.lane.b32.xlu0 %v409, 111
        %v574 = vpop.permute.xlu0 %573
        %575 = vrot.lane.b32.xlu0 %v410, 111
        %v576 = vpop.permute.xlu0 %575
        %vm577 = vcmp.lt.s32.totalorder %v441, 111
        %v578 = vsel %vm577, %v574, %v576
        %v579 = vsel %vm577, %v576, %v574
        %v580 = vlaneseq
        %v581 = vshrl.u32 %v580, 7
        %v582 = vsub.s32 7, %v581
        %v583 = vrot.slane %v434, %v582
        %v584 = vlaneseq
        %v585 = vshrl.u32 %v584, 7
        %v586 = vsub.s32 7, %v585
        %v587 = vrot.slane %v435, %v586
        %v588 = vmul.f32 %v578, %v583
        %v589 = vmul.f32 %v579, %v587
        %590 = vst [vmem:[#allocation2 + $0x80] sm:$0xff] %v588
        %591 = vst [vmem:[#allocation2 + $0x88] sm:$0xff] %v589
        %v592 = vld [vmem:[%s4] sm:$0xff]
        %v593 = vld [vmem:[%s4 + $0x8] sm:$0x3]
        %v594 = vld [vmem:[#allocation2] sm:$0xff]
        %v595 = vld [vmem:[#allocation2 + $0x8] sm:$0xff]
        %v596 = vld [vmem:[#allocation2 + $0x10] sm:$0xff]
        %v597 = vld [vmem:[#allocation2 + $0x18] sm:$0xff]
        %v598 = vld [vmem:[#allocation2 + $0x20] sm:$0xff]
        %v599 = vld [vmem:[#allocation2 + $0x28] sm:$0xff]
        %v600 = vld [vmem:[#allocation2 + $0x30] sm:$0xff]
        %v601 = vld [vmem:[#allocation2 + $0x38] sm:$0xff]
        %v602 = vld [vmem:[#allocation2 + $0x40] sm:$0xff]
        %v603 = vld [vmem:[#allocation2 + $0x48] sm:$0xff]
        %v604 = vld [vmem:[#allocation2 + $0x50] sm:$0xff]
        %v605 = vld [vmem:[#allocation2 + $0x58] sm:$0xff]
        %v606 = vld [vmem:[#allocation2 + $0x60] sm:$0xff]
        %v607 = vld [vmem:[#allocation2 + $0x68] sm:$0xff]
        %v608 = vld [vmem:[#allocation2 + $0x70] sm:$0xff]
        %v609 = vld [vmem:[#allocation2 + $0x78] sm:$0xff]
        %v610 = vld [vmem:[#allocation2 + $0x80] sm:$0xff]
        %v611 = vld [vmem:[#allocation2 + $0x88] sm:$0xff]
        %v612 = vld [vmem:[%s5] sm:$0xff]
        %v613 = vld [vmem:[%s5 + $0x8] sm:$0x3]
        %615 = vset.pattern.permute.xlu0 0
        %616 = vperm.xlu0 %615, %v612
        %v617 = vpop.permute.xlu0 %616
        %620 = vset.pattern.permute.xlu0 0
        %621 = vperm.xlu0 %620, %v613
        %v622 = vpop.permute.xlu0 %621
        %vm624 = vcmask 588800
        %v626 = vsel %vm624, %v592, 0
        %v629 = vsel %vm624, %v593, 0
        %631 = vmatprep.subr.mxu0 %v595
        %632 = vmatpush1.msra.mxu0 %v594
        %633 = vmatprep.subr.mxu0 %v597
        %634 = vmatpush1.msra.mxu0 %v596
        %635 = vmatprep.subr.mxu0 %v599
        %636 = vmatpush1.msra.mxu0 %v598
        %637 = vmatprep.subr.mxu0 %v601
        %638 = vmatpush1.msra.mxu0 %v600
        %639 = vmatprep.subr.mxu0 %v603
        %640 = vmatpush1.msra.mxu0 %v602
        %641 = vmatprep.subr.mxu0 %v605
        %642 = vmatpush1.msra.mxu0 %v604
        %643 = vmatprep.subr.mxu0 %v607
        %644 = vmatpush1.msra.mxu0 %v606
        %645 = vmatprep.subr.mxu0 %v609
        %646 = vmatpush1.msra.mxu0 %v608
        %647 = vmatprep.subr.mxu0 %v611
        %648 = vmatpush1.msra.mxu0 %v610
        %649 = vmatprep.subr.mxu0 0.0
        %650 = vmatpush1.msra.mxu0 0.0
        %651 = vmatprep.subr.mxu0 0.0
        %652 = vmatpush1.msra.mxu0 0.0
        %653 = vmatprep.subr.mxu0 0.0
        %654 = vmatpush1.msra.mxu0 0.0
        %655 = vmatprep.subr.mxu0 0.0
        %656 = vmatpush1.msra.mxu0 0.0
        %657 = vmatprep.subr.mxu0 0.0
        %658 = vmatpush1.msra.mxu0 0.0
        %659 = vmatprep.subr.mxu0 0.0
        %660 = vmatpush1.msra.mxu0 0.0
        %661 = vmatprep.subr.mxu0 0.0
        %662 = vmatpush1.msra.mxu0 0.0
        %663 = vmatprep.subr.mxu0 0.0
        %664 = vmatpush1.msra.mxu0 0.0
        %665 = vmatprep.subr.mxu0 0.0
        %666 = vmatpush1.msra.mxu0 0.0
        %667 = vmatprep.subr.mxu0 0.0
        %668 = vmatpush1.msra.mxu0 0.0
        %669 = vmatprep.subr.mxu0 0.0
        %670 = vmatpush1.msra.mxu0 0.0
        %671 = vmatprep.subr.mxu0 0.0
        %672 = vmatpush1.msra.mxu0 0.0
        %673 = vmatprep.subr.mxu0 0.0
        %674 = vmatpush1.msra.mxu0 0.0
        %675 = vmatprep.subr.mxu0 0.0
        %676 = vmatpush1.msra.mxu0 0.0
        %677 = vmatprep.subr.mxu0 0.0
        %678 = vmatpush1.msra.mxu0 0.0
        %679 = vmatprep.subr.mxu0 0.0
        %680 = vmatpush1.msra.mxu0 0.0
        %681 = vmatprep.subr.mxu0 0.0
        %682 = vmatpush1.msra.mxu0 0.0
        %683 = vmatprep.subr.mxu0 0.0
        %684 = vmatpush1.msra.mxu0 0.0
        %685 = vmatprep.subr.mxu0 0.0
        %686 = vmatpush1.msra.mxu0 0.0
        %687 = vmatprep.subr.mxu0 0.0
        %688 = vmatpush1.msra.mxu0 0.0
        %689 = vmatprep.subr.mxu0 0.0
        %690 = vmatpush1.msra.mxu0 0.0
        %691 = vmatprep.subr.mxu0 0.0
        %692 = vmatpush1.msra.mxu0 0.0
        %693 = vmatprep.subr.mxu0 0.0
        %694 = vmatpush1.msra.mxu0 0.0
        %695 = vmatprep.mubr.f32.mxu0 0.0
        %696 = vmatmul.mubr.f32.gmra.mrb[0].mxu0 %v626
        %v697 = vpop.f32.mrb[0].mxu0
        %v698 = vadd.f32 %v617, %v697
        %v699 = vpop.f32.mrb[0].mxu0
        %v700 = vadd.f32 %v617, %v699
        %701 = vmatprep.mubr.f32.mxu0 0.0
        %702 = vmatmul.mubr.f32.gmra.mrb[0].mxu0 %v629
        %v703 = vpop.f32.mrb[0].mxu0
        %v704 = vadd.f32 %v622, %v703
        %v705 = vpop.f32.mrb[0].mxu0
        %v706 = vadd.f32 %v622, %v705
        %707 = vdwg.mxu0
        %v708 = vmax.f32 %v698, 0.0
        %v709 = vmax.f32 %v700, 0.0
        %v712 = vcombine.low %v704, %v706
        %v713 = vrot.slane %v712, 7
        %715 = vst [vmem:[%s301] sm:$0x66] %v713
        %v716 = vld [vmem:[%s6] sm:$0xff]
        %718 = vset.pattern.permute.xlu0 0
        %719 = vperm.xlu0 %718, %v716
        %v720 = vpop.permute.xlu0 %719
        %v722 = vmul.f32 %v708, %v720
        %v723 = vmul.f32 %v709, %v720
        %v724 = vrot.slane %v722, 4
        %v725 = vadd.f32 %v722, %v724
        %v726 = vrot.slane %v725, 2
        %v727 = vadd.f32 %v725, %v726
        %v728 = vrot.slane %v727, 1
        %v729 = vadd.f32 %v727, %v728
        %v730 = vrot.slane %v723, 4
        %v731 = vadd.f32 %v723, %v730
        %v732 = vrot.slane %v731, 2
        %v733 = vadd.f32 %v731, %v732
        %v734 = vrot.slane %v733, 1
        %v735 = vadd.f32 %v733, %v734
        %v736 = vld [vmem:[#allocation3] sm:$0x1]
        %738 = vset.pattern.permute.xlu0 0
        %739 = vperm.xlu0 %738, %v736
        %v740 = vpop.permute.xlu0 %739
        %v742 = vlaneseq
        %v743 = vshrl.u32 %v742, 7
        %v744 = vsub.s32 0, %v743
        %v745 = vrot.slane %v740, %v744
        %v746 = vadd.f32 %v729, %v745
        %v747 = vadd.f32 %v735, %v745
        %v750 = vcombine.low %v746, %v747
        %v752 = vunpack.c.l.s4 1966171168
        %v753 = vunpack.c.0.s8 %v752
        %v754 = vlaneseq
        %v755 = vshrl.u32 %v754, 7
        %v756 = vsub.s32 %v753, %v755
        %v757 = vrot.slane %v750, %v756
        %v759 = vunpack.c.l.s4 1966171168
        %v760 = vunpack.c.0.s8 %v759
        %v761 = vlaneseq
        %v762 = vshrl.u32 %v761, 7
        %v763 = vsub.s32 %v760, %v762
        %v764 = vrot.slane %v757, %v763
        %s766 = scalar_lea.vmem %s301, 3 [#allocation4]
        %767 = vst.msk [vmem:[%s766] ss:$4 sm:$0x3] %vm432, %v764
        %s768 = sand.u32 %s205, 1
        %s769 = scalar_lea.sflag [#allocation5], %s768
        %s770 = sand.u32 %s205, 1
        %s771 = smul.addr %s770, 8
        %s772 = scalar_lea.vmem [#allocation4], %s771
        // Predicated region
        $region53: #{tpu_custom_call.1} parent=51 // pred_check
          %p773 = pneg %p215
        $region54: #{tpu_custom_call.1} parent=51 // pred_check_branch
          %775 = sbr.rel (%p773) target = $region56
        $region55: #{tpu_custom_call.1} parent=51 // pred_region
          %s776 = smul.u32 2, %s24
          %s778 = ssub.s32 128, 128
          %779 = vsyncadd %s769, %s778
          %s780 = smul.addr %s776, 64
          %s781 = scalar_lea.hbm %s8, %s780
          %s783 = sshll.u32 %s772, 4
          %s784 = int_to_ptr.vmem [resolvable:$true] %s783
          %786 = dma.vmem_to_hbm [thread:$0]  %s784, 128, %s781, %s769
        $region56: #{tpu_custom_call.1} parent=51 // pred_fallthru
          _
      $region52: #{tpu_custom_call.1} parent=5 // pred_fallthru
        _
      %p787 = scmp.le.s32.totalorder 2, %s19
      // Predicated region
      $region57: #{tpu_custom_call.1} parent=5 // pred_check
        %p788 = pneg %p787
      $region58: #{tpu_custom_call.1} parent=5 // pred_check_branch
        %790 = sbr.rel (%p788) target = $region60
      $region59: #{tpu_custom_call.1} parent=5 // pred_region
        %s791 = ssub.s32 %s19, 2
        // Predicated region
        $region61: #{tpu_custom_call.1} parent=59 // pred_check
          %p792 = pneg %p221
        $region62: #{tpu_custom_call.1} parent=59 // pred_check_branch
          %794 = sbr.rel (%p792) target = $region64
        $region63: #{tpu_custom_call.1} parent=59 // pred_region
          %s795 = sand.u32 %s206, 1
          %s796 = scalar_lea.sflag [#allocation5], %s795
          %s797 = sand.u32 %s206, 1
          %s798 = smul.addr %s797, 8
          %s799 = scalar_lea.vmem [#allocation4], %s798
          %800 = dma.done %s796, 128
        $region64: #{tpu_custom_call.1} parent=59 // pred_fallthru
          _
      $region60: #{tpu_custom_call.1} parent=5 // pred_fallthru
        _
    $region6: #{tpu_custom_call.1} parent=1 // loop_footer
      %s23 = sadd.s32 1, %s19
    $region7: #{tpu_custom_call.1} parent=1 // loop_footer_branch
      %18 = sbr.rel target = $region3
    $region8: #{tpu_custom_call.1} parent=1 // loop_exit
      _
    %801 = vsyncpa [#allocation5], 1
    %s802 = scalar_lea.sflag [#allocation5], 1
    %803 = vsyncpa %s802, 1

</llo_original>
